<compile_context>
chip_gen: v5e
topology: v5e:2x2
jax: 0.10.0
libtpu: 0.0.40
codegen_flags: <defaults>
</compile_context>

<pallas_src>
import functools

import jax
import jax.numpy as jnp
from jax.experimental import pallas as pl
from jax.experimental.pallas import tpu as pltpu


def _linear_logsoftmax_kernel(p_ref, xT_ref, o_ref):
    """Fused Linear + log_softmax on one batch tile.

    p_ref : SMEM (Fout, Fin+1)  -- [w.T | b], scalar-indexed
    xT_ref: VMEM (Fin, TB)      -- batch on the lane axis
    o_ref : VMEM (Fout, TB)     -- lane-dense output tile
    """
    fin = xT_ref.shape[0]
    fout = o_ref.shape[0]

    xT = xT_ref[...]  # (Fin, TB) f32

    # VPU multiply-add, fully unrolled over the tiny contraction.
    # (Routing a 5x2 contraction through the MXU would waste the whole tile.)
    rows = []
    for j in range(fout):
        acc = p_ref[j, 0] * xT[0:1, :]                 # (1, TB)
        for k in range(1, fin):
            acc = acc + p_ref[j, k] * xT[k:k + 1, :]
        rows.append(acc + p_ref[j, fin])               # + bias
    logits = jnp.concatenate(rows, axis=0)             # (Fout, TB) f32

    # Numerically stable log_softmax over the Fout (sublane) axis:
    # row-wise max/sub/add on the VPU, exp/log on the EUP.
    m = jnp.max(logits, axis=0, keepdims=True)         # (1, TB)
    shifted = logits - m
    lse = jnp.log(jnp.sum(jnp.exp(shifted), axis=0, keepdims=True))
    o_ref[...] = (shifted - lse).astype(o_ref.dtype)


@functools.partial(jax.jit, static_argnames=("max_tile_b",))
def neural_network_forward(x, w, b, *, max_tile_b=512):
    """x: (B, 5) f32, w: (5, 2) f32, b: (2,) f32 -> (B, 2) f32 log-probs."""
    B, Fin = x.shape
    Fout = w.shape[1]

    # Batch tile on the lane axis: multiple of 128 lanes, capped at max_tile_b.
    TB = min(max_tile_b, 128 * pl.cdiv(B, 128))
    Bp = TB * pl.cdiv(B, TB)

    # Transposed, zero-padded input: (Fin, Bp). Padded columns produce valid
    # (bias-only) log-probs and are sliced away below.
    xT = jnp.pad(x.astype(jnp.float32), ((0, Bp - B), (0, 0))).T

    # Fused parameter table [w.T | b] -> (Fout, Fin+1), kept in SMEM.
    p = jnp.concatenate(
        [w.T.astype(jnp.float32), b.reshape(Fout, 1).astype(jnp.float32)],
        axis=1,
    )

    outT = pl.pallas_call(
        _linear_logsoftmax_kernel,
        out_shape=jax.ShapeDtypeStruct((Fout, Bp), jnp.float32),
        grid_spec=pltpu.PrefetchScalarGridSpec(
            num_scalar_prefetch=0,
            grid=(Bp // TB,),
            in_specs=[
                # Whole (tiny) parameter table, resident in SMEM.
                pl.BlockSpec(memory_space=pltpu.MemorySpace.SMEM),
                # One batch tile per grid step, pipelined by BlockSpec.
                pl.BlockSpec((Fin, TB), lambda i: (0, i)),
            ],
            out_specs=pl.BlockSpec((Fout, TB), lambda i: (0, i)),
        ),
        compiler_params=pltpu.CompilerParams(
            # Batch tiles are independent -> megacore-shardable on v7x.
            dimension_semantics=("parallel",),
        ),
    )(p, xT)

    # Back to the PyTorch (B, Fout) convention.
    return outT[:, :B].T


if __name__ == "__main__":
    key = jax.random.PRNGKey(0)
    k_x, k_w, k_b = jax.random.split(key, 3)

    B, Fin, Fout = 8, 5, 2

    # Deterministic init mimicking nn.Linear's uniform(-1/sqrt(fan_in), ...).
    bound = 1.0 / jnp.sqrt(jnp.float32(Fin))
    w = jax.random.uniform(k_w, (Fin, Fout), jnp.float32, -bound, bound)
    b = jax.random.uniform(k_b, (Fout,), jnp.float32, -bound, bound)
    x = jax.random.normal(k_x, (B, Fin), jnp.float32)

    out = jax.block_until_ready(neural_network_forward(x, w, b))

    # Sanity check against plain-JAX reference.
    ref = jax.nn.log_softmax(x @ w + b[None, :], axis=1)
    assert out.shape == (B, Fout)
    assert jnp.allclose(out, ref, atol=1e-5, rtol=1e-5), float(
        jnp.max(jnp.abs(out - ref))
    )

    print("KERNEL_OK")
</pallas_src>

<mosaic_0001>
module attributes {stable_mosaic.version = 11 : i64} {
  func.func @_linear_logsoftmax_kernel(%arg0: i32, %arg1: memref<2x6xf32, #tpu.memory_space<smem>>, %arg2: memref<5x128xf32, #tpu.memory_space<vmem>>, %arg3: memref<2x128xf32, #tpu.memory_space<vmem>>) attributes {dimension_semantics = [#tpu.dimension_semantics<parallel>], iteration_bounds = array<i64: 1>, scalar_prefetch = 0 : i64, scratch_operands = 0 : i64, tpu.core_type = #tpu.core_type<tc>, window_params = [{transform_indices = @transform_0, window_bounds = array<i64: 2, 6>}, {transform_indices = @transform_1, window_bounds = array<i64: 5, 128>}, {transform_indices = @transform_2, window_bounds = array<i64: 2, 128>}]} {
    %c0 = arith.constant 0 : index
    %c0_0 = arith.constant 0 : index
    %0 = vector.load %arg2[%c0, %c0_0] : memref<5x128xf32, #tpu.memory_space<vmem>>, vector<5x128xf32>
    %c0_1 = arith.constant 0 : index
    %c0_2 = arith.constant 0 : index
    %1 = memref.load %arg1[%c0_1, %c0_2] : memref<2x6xf32, #tpu.memory_space<smem>>
    %2 = vector.extract_strided_slice %0 {offsets = [0, 0], sizes = [1, 128], strides = [1, 1]} : vector<5x128xf32> to vector<1x128xf32>
    %3 = vector.broadcast %1 : f32 to vector<1x128xf32>
    %4 = arith.mulf %3, %2 : vector<1x128xf32>
    %c0_3 = arith.constant 0 : index
    %c1 = arith.constant 1 : index
    %5 = memref.load %arg1[%c0_3, %c1] : memref<2x6xf32, #tpu.memory_space<smem>>
    %6 = vector.extract_strided_slice %0 {offsets = [1, 0], sizes = [1, 128], strides = [1, 1]} : vector<5x128xf32> to vector<1x128xf32>
    %7 = vector.broadcast %5 : f32 to vector<1x128xf32>
    %8 = arith.mulf %7, %6 : vector<1x128xf32>
    %9 = arith.addf %4, %8 : vector<1x128xf32>
    %c0_4 = arith.constant 0 : index
    %c2 = arith.constant 2 : index
    %10 = memref.load %arg1[%c0_4, %c2] : memref<2x6xf32, #tpu.memory_space<smem>>
    %11 = vector.extract_strided_slice %0 {offsets = [2, 0], sizes = [1, 128], strides = [1, 1]} : vector<5x128xf32> to vector<1x128xf32>
    %12 = vector.broadcast %10 : f32 to vector<1x128xf32>
    %13 = arith.mulf %12, %11 : vector<1x128xf32>
    %14 = arith.addf %9, %13 : vector<1x128xf32>
    %c0_5 = arith.constant 0 : index
    %c3 = arith.constant 3 : index
    %15 = memref.load %arg1[%c0_5, %c3] : memref<2x6xf32, #tpu.memory_space<smem>>
    %16 = vector.extract_strided_slice %0 {offsets = [3, 0], sizes = [1, 128], strides = [1, 1]} : vector<5x128xf32> to vector<1x128xf32>
    %17 = vector.broadcast %15 : f32 to vector<1x128xf32>
    %18 = arith.mulf %17, %16 : vector<1x128xf32>
    %19 = arith.addf %14, %18 : vector<1x128xf32>
    %c0_6 = arith.constant 0 : index
    %c4 = arith.constant 4 : index
    %20 = memref.load %arg1[%c0_6, %c4] : memref<2x6xf32, #tpu.memory_space<smem>>
    %21 = vector.extract_strided_slice %0 {offsets = [4, 0], sizes = [1, 128], strides = [1, 1]} : vector<5x128xf32> to vector<1x128xf32>
    %22 = vector.broadcast %20 : f32 to vector<1x128xf32>
    %23 = arith.mulf %22, %21 : vector<1x128xf32>
    %24 = arith.addf %19, %23 : vector<1x128xf32>
    %c0_7 = arith.constant 0 : index
    %c5 = arith.constant 5 : index
    %25 = memref.load %arg1[%c0_7, %c5] : memref<2x6xf32, #tpu.memory_space<smem>>
    %26 = vector.broadcast %25 : f32 to vector<1x128xf32>
    %27 = arith.addf %24, %26 : vector<1x128xf32>
    %c1_8 = arith.constant 1 : index
    %c0_9 = arith.constant 0 : index
    %28 = memref.load %arg1[%c1_8, %c0_9] : memref<2x6xf32, #tpu.memory_space<smem>>
    %29 = vector.extract_strided_slice %0 {offsets = [0, 0], sizes = [1, 128], strides = [1, 1]} : vector<5x128xf32> to vector<1x128xf32>
    %30 = vector.broadcast %28 : f32 to vector<1x128xf32>
    %31 = arith.mulf %30, %29 : vector<1x128xf32>
    %c1_10 = arith.constant 1 : index
    %c1_11 = arith.constant 1 : index
    %32 = memref.load %arg1[%c1_10, %c1_11] : memref<2x6xf32, #tpu.memory_space<smem>>
    %33 = vector.extract_strided_slice %0 {offsets = [1, 0], sizes = [1, 128], strides = [1, 1]} : vector<5x128xf32> to vector<1x128xf32>
    %34 = vector.broadcast %32 : f32 to vector<1x128xf32>
    %35 = arith.mulf %34, %33 : vector<1x128xf32>
    %36 = arith.addf %31, %35 : vector<1x128xf32>
    %c1_12 = arith.constant 1 : index
    %c2_13 = arith.constant 2 : index
    %37 = memref.load %arg1[%c1_12, %c2_13] : memref<2x6xf32, #tpu.memory_space<smem>>
    %38 = vector.extract_strided_slice %0 {offsets = [2, 0], sizes = [1, 128], strides = [1, 1]} : vector<5x128xf32> to vector<1x128xf32>
    %39 = vector.broadcast %37 : f32 to vector<1x128xf32>
    %40 = arith.mulf %39, %38 : vector<1x128xf32>
    %41 = arith.addf %36, %40 : vector<1x128xf32>
    %c1_14 = arith.constant 1 : index
    %c3_15 = arith.constant 3 : index
    %42 = memref.load %arg1[%c1_14, %c3_15] : memref<2x6xf32, #tpu.memory_space<smem>>
    %43 = vector.extract_strided_slice %0 {offsets = [3, 0], sizes = [1, 128], strides = [1, 1]} : vector<5x128xf32> to vector<1x128xf32>
    %44 = vector.broadcast %42 : f32 to vector<1x128xf32>
    %45 = arith.mulf %44, %43 : vector<1x128xf32>
    %46 = arith.addf %41, %45 : vector<1x128xf32>
    %c1_16 = arith.constant 1 : index
    %c4_17 = arith.constant 4 : index
    %47 = memref.load %arg1[%c1_16, %c4_17] : memref<2x6xf32, #tpu.memory_space<smem>>
    %48 = vector.extract_strided_slice %0 {offsets = [4, 0], sizes = [1, 128], strides = [1, 1]} : vector<5x128xf32> to vector<1x128xf32>
    %49 = vector.broadcast %47 : f32 to vector<1x128xf32>
    %50 = arith.mulf %49, %48 : vector<1x128xf32>
    %51 = arith.addf %46, %50 : vector<1x128xf32>
    %c1_18 = arith.constant 1 : index
    %c5_19 = arith.constant 5 : index
    %52 = memref.load %arg1[%c1_18, %c5_19] : memref<2x6xf32, #tpu.memory_space<smem>>
    %53 = vector.broadcast %52 : f32 to vector<1x128xf32>
    %54 = arith.addf %51, %53 : vector<1x128xf32>
    %55 = tpu.concatenate %27, %54 in 0 : vector<1x128xf32>, vector<1x128xf32> -> vector<2x128xf32>
    %cst = arith.constant dense<0xFF800000> : vector<128xf32>
    %56 = vector.multi_reduction <maximumf>, %55, %cst [0] : vector<2x128xf32> to vector<128xf32>
    %57 = vector.shape_cast %56 : vector<128xf32> to vector<1x128xf32>
    %58 = vector.broadcast %57 : vector<1x128xf32> to vector<2x128xf32>
    %59 = arith.subf %55, %58 : vector<2x128xf32>
    %60 = math.exp %59 : vector<2x128xf32>
    %cst_20 = arith.constant dense<0.000000e+00> : vector<128xf32>
    %61 = vector.multi_reduction <add>, %60, %cst_20 [0] : vector<2x128xf32> to vector<128xf32>
    %62 = vector.shape_cast %61 : vector<128xf32> to vector<1x128xf32>
    %63 = math.log %62 : vector<1x128xf32>
    %64 = vector.broadcast %63 : vector<1x128xf32> to vector<2x128xf32>
    %65 = arith.subf %59, %64 : vector<2x128xf32>
    %c0_21 = arith.constant 0 : index
    %c0_22 = arith.constant 0 : index
    %66 = vector.load %arg3[%c0_21, %c0_22] : memref<2x128xf32, #tpu.memory_space<vmem>>, vector<2x128xf32>
    tpu.vector_store %arg3[%c0_21, %c0_22], %65 {strides = array<i32>} : memref<2x128xf32, #tpu.memory_space<vmem>>, vector<2x128xf32>,
    return
  }
  func.func @transform_0(%arg0: i32) -> (i32, i32) {
    %c0_i32 = arith.constant 0 : i32
    %c0_i32_0 = arith.constant 0 : i32
    %c0_i32_1 = arith.constant 0 : i32
    return %c0_i32, %c0_i32_0 : i32, i32
  }
  func.func @transform_1(%arg0: i32) -> (i32, i32) {
    %c0_i32 = arith.constant 0 : i32
    %c0_i32_0 = arith.constant 0 : i32
    return %c0_i32, %arg0 : i32, i32
  }
  func.func @transform_2(%arg0: i32) -> (i32, i32) {
    %c0_i32 = arith.constant 0 : i32
    %c0_i32_0 = arith.constant 0 : i32
    return %c0_i32, %arg0 : i32, i32
  }
}

</mosaic_0001>

<llo_original>
// kernel: neural_network_forward.1
$region0: #{neural_network_forward.1}
  #allocation0 [shape = 'u32[]', space=smem, size = 0x4, offset = 0x4, fixed_abs, tag = 'smem constant byte address 0x4 - core index']
  #allocation1 [shape = 'u32[72,128]{1,0:T(1,128)}', space=vmem, size = 0x9000, scoped, tag = 'internal scratch']
  %s0 = inlined_call_operand.vmem [shape: f32[2,6], index: 0, kind: input, shape index: {}]
  %s1 = inlined_call_operand.vmem [shape: f32[5,128], index: 1, kind: input, shape index: {}]
  %s2 = inlined_call_operand.vmem [shape: f32[2,128], index: 2, kind: output, shape index: {}]
  %s3 = sld [smem:[#allocation0]]
  $region22: #{neural_network_forward.1} parent=0
    _
  %s5 = ssub.s32 1, %s3
  %s6 = scalar_select 0, %s5, %s3
  $region1: #{neural_network_forward.1} parent=0
    #allocation2 [shape = 'u8[1024]{0}', space=smem, size = 0x400, scoped, tag = 'input window, operand 0, single buffered']
    #allocation3 [shape = 's32[1]{0}', space=sflag, size = 0x4, scoped, tag = 'scoped memory for neural_network_forward.1']
    %7 = vsyncpa [#allocation3], 0
    // Predicated region
    $region2: #{neural_network_forward.1} parent=1 // pred_check
      _
    $region3: #{neural_network_forward.1} parent=1 // pred_check_branch
      %9 = sbr.rel (0) target = $region5
    $region4: #{neural_network_forward.1} parent=1 // pred_region
      %11 = vsyncadd [#allocation3], 0
      %s13 = sshll.u32 %s0, 4
      %s14 = int_to_ptr.vmem [resolvable:$true] %s13
      %16 = dma.vmem_to_smem %s14, 32, [#allocation2], [#allocation3]
    $region5: #{neural_network_forward.1} parent=1 // pred_fallthru
      _
    // Predicated region
    $region6: #{neural_network_forward.1} parent=1 // pred_check
      _
    $region7: #{neural_network_forward.1} parent=1 // pred_check_branch
      %18 = sbr.rel (0) target = $region9
    $region8: #{neural_network_forward.1} parent=1 // pred_region
      _
    $region9: #{neural_network_forward.1} parent=1 // pred_fallthru
      _
    // Predicated region
    $region10: #{neural_network_forward.1} parent=1 // pred_check
      _
    $region11: #{neural_network_forward.1} parent=1 // pred_check_branch
      %20 = sbr.rel (0) target = $region13
    $region12: #{neural_network_forward.1} parent=1 // pred_region
      %22 = dma.done [#allocation3], 32
    $region13: #{neural_network_forward.1} parent=1 // pred_fallthru
      _
    %23 = sfence
    %v24 = vld [vmem:[%s1] sm:$0x1f]
    %s25 = sld [smem:[#allocation2]]
    %v26 = vstv %s25
    %v27 = vmul.f32 %v26, %v24
    %s28 = sld [smem:[#allocation2 + $0x1]]
    %v29 = vstv %s28
    %v30 = vmul.f32 %v29, %v24
    %v32 = vrot.slane %v30, 1
    %v34 = vadd.f32 %v27, %v32
    %s35 = sld [smem:[#allocation2 + $0x2]]
    %v36 = vstv %s35
    %v37 = vmul.f32 %v36, %v24
    %v39 = vrot.slane %v37, 2
    %v41 = vadd.f32 %v34, %v39
    %s42 = sld [smem:[#allocation2 + $0x3]]
    %v43 = vstv %s42
    %v44 = vmul.f32 %v43, %v24
    %v46 = vrot.slane %v44, 3
    %v48 = vadd.f32 %v41, %v46
    %s49 = sld [smem:[#allocation2 + $0x4]]
    %v50 = vstv %s49
    %v51 = vmul.f32 %v50, %v24
    %v53 = vrot.slane %v51, 4
    %v55 = vadd.f32 %v48, %v53
    %s56 = sld [smem:[#allocation2 + $0x5]]
    %v57 = vstv %s56
    %v58 = vadd.f32 %v55, %v57
    %s59 = sld [smem:[#allocation2 + $0x80]]
    %v60 = vstv %s59
    %v61 = vmul.f32 %v60, %v24
    %s62 = sld [smem:[#allocation2 + $0x81]]
    %v63 = vstv %s62
    %v64 = vmul.f32 %v63, %v24
    %v66 = vrot.slane %v64, 1
    %v68 = vadd.f32 %v61, %v66
    %s69 = sld [smem:[#allocation2 + $0x82]]
    %v70 = vstv %s69
    %v71 = vmul.f32 %v70, %v24
    %v73 = vrot.slane %v71, 2
    %v75 = vadd.f32 %v68, %v73
    %s76 = sld [smem:[#allocation2 + $0x83]]
    %v77 = vstv %s76
    %v78 = vmul.f32 %v77, %v24
    %v80 = vrot.slane %v78, 3
    %v82 = vadd.f32 %v75, %v80
    %s83 = sld [smem:[#allocation2 + $0x84]]
    %v84 = vstv %s83
    %v85 = vmul.f32 %v84, %v24
    %v87 = vrot.slane %v85, 4
    %v89 = vadd.f32 %v82, %v87
    %s90 = sld [smem:[#allocation2 + $0x85]]
    %v91 = vstv %s90
    %v92 = vadd.f32 %v89, %v91
    %v94 = vrot.slane %v92, 7
    %vm96 = vcmask 1040384
    %v97 = vsel %vm96, %v58, %v94
    %vm98 = vcmask 1041408
    %v99 = vsel %vm98, %v97, -inf
    %v100 = vrot.slane %v99, 4
    %v101 = vmax.f32 %v99, %v100
    %v102 = vrot.slane %v101, 2
    %v103 = vmax.f32 %v101, %v102
    %v104 = vrot.slane %v103, 1
    %v105 = vmax.f32 %v103, %v104
    %v106 = vsub.f32 %v97, %v105
    %v107 = vmul.f32 %v106, 1.442695
    %v108 = vpow.pop %v107
    %v109 = vsel %vm98, %v108, 0.0
    %v110 = vrot.slane %v109, 4
    %v111 = vadd.f32 %v109, %v110
    %v112 = vrot.slane %v111, 2
    %v113 = vadd.f32 %v111, %v112
    %v114 = vrot.slane %v113, 1
    %v115 = vadd.f32 %v113, %v114
    %v116 = vlog2.pop %v115
    %v117 = vmul.f32 %v116, 0.6931472
    %v118 = vsub.f32 %v106, %v117
    %119 = vst [vmem:[%s2] sm:$0x3] %v118
    // Predicated region
    $region14: #{neural_network_forward.1} parent=1 // pred_check
      _
    $region15: #{neural_network_forward.1} parent=1 // pred_check_branch
      %121 = sbr.rel (0) target = $region17
    $region16: #{neural_network_forward.1} parent=1 // pred_region
      _
    $region17: #{neural_network_forward.1} parent=1 // pred_fallthru
      _
    // Predicated region
    $region18: #{neural_network_forward.1} parent=1 // pred_check
      _
    $region19: #{neural_network_forward.1} parent=1 // pred_check_branch
      %123 = sbr.rel (0) target = $region21
    $region20: #{neural_network_forward.1} parent=1 // pred_region
      _
    $region21: #{neural_network_forward.1} parent=1 // pred_fallthru
      _
    %124 = vsyncpa [#allocation3], 1

</llo_original>
